<compile_context>
chip_gen: v7x
topology: tpu7x:2x2x1
jax: 0.10.0
libtpu: 0.0.40
codegen_flags: <defaults>
</compile_context>

<pallas_src>
import functools

import jax
import jax.numpy as jnp
import numpy as np
from jax.experimental import pallas as pl
from jax.experimental.pallas import tpu as pltpu


# ------------------------------ Pallas kernels ------------------------------

def _attention_kernel(kernel_num, x_ref, fc_w_ref, fc_b_ref,
                      head_w_ref, head_b_ref, out_ref):
    """Attention_od forward (BN + 1/T already folded into the weights).

    x_ref      : (B, C_in, H*W)   channel-first, H*W on lanes
    fc_w_ref   : (C_in, A)        fc weight with BN scale folded in
    fc_b_ref   : (1, A)           folded BN bias
    head_w_ref : (A, D)           [channel | filter | spatial | kernel] heads / T
    head_b_ref : (1, D)
    out_ref    : (B, D)           sigmoid everywhere, softmax on last Kn columns
    """
    x = x_ref[...].astype(jnp.float32)
    # AdaptiveAvgPool2d(1): reduce the lane (H*W) axis.
    pooled = jnp.mean(x, axis=-1)                                   # (B, C_in)

    # fc -> (folded, eval-mode) BN -> ReLU
    h = jnp.dot(pooled, fc_w_ref[...],
                preferred_element_type=jnp.float32) + fc_b_ref[...]
    h = jnp.maximum(h, 0.0)                                         # (B, A)

    # All four attention heads in a single lane-dense matmul.
    logits = jnp.dot(h, head_w_ref[...],
                     preferred_element_type=jnp.float32) + head_b_ref[...]

    d_tot = logits.shape[-1]
    col = jax.lax.broadcasted_iota(jnp.int32, logits.shape, 1)
    is_ker = col >= (d_tot - kernel_num)

    sig = jax.nn.sigmoid(logits)

    # Masked softmax over the kernel-attention columns only.
    kl = jnp.where(is_ker, logits, -jnp.inf)
    m = jnp.max(kl, axis=-1, keepdims=True)
    e = jnp.where(is_ker, jnp.exp(kl - m), 0.0)
    denom = jnp.sum(e, axis=-1, keepdims=True)
    soft = e * pl.reciprocal(denom, approx=False)

    out_ref[...] = jnp.where(is_ker, soft, sig)


def _odconv_kernel(with_residual, patches_ref, scale_ref, ker_ref, w_ref,
                   fil_ref, *rest):
    """One batch element of the ODConv2d dynamic convolution.

    patches_ref : (1, H*W, K*K*C_in)     im2col patches of this sample
    scale_ref   : (1, 1,   K*K*C_in)     spatial_att(ky,kx) * channel_att(ci)
    ker_ref     : (1, 1,   Kn)           kernel attention (softmax weights)
    w_ref       : (Kn, K*K*C_in, C_out)  candidate weights (resident every step)
    fil_ref     : (1, 1,   C_out)        filter attention
    rest        : [res_ref (1,H*W,C_out)] + out_ref (1,H*W,C_out)
    """
    if with_residual:
        res_ref, out_ref = rest
    else:
        (out_ref,) = rest

    kn = w_ref.shape[0]

    # Channel & spatial attention folded into the patch columns.
    xs = patches_ref[0] * scale_ref[0]                       # (HW, K2*Cin)

    # Kernel attention: mix the Kn candidate weights for this sample.
    kr = ker_ref[0]                                          # (1, Kn)
    w_mix = w_ref[0] * kr[:, 0:1]
    for k in range(1, kn):
        w_mix = w_mix + w_ref[k] * kr[:, k:k + 1]            # (K2*Cin, Cout)

    # The 3x3 convolution as a single MXU matmul.
    acc = jnp.dot(xs, w_mix, preferred_element_type=jnp.float32)   # (HW, Cout)

    # Filter attention + the nn.ReLU that follows ODConv2d in the Sequential.
    y = jnp.maximum(acc * fil_ref[0], 0.0)
    if with_residual:
        # Fused residual add + final ReLU of ResidualBlock_od.
        y = jnp.maximum(y + res_ref[0], 0.0)
    out_ref[0] = y.astype(out_ref.dtype)


# --------------------------------- wrappers ---------------------------------

def _fold_attention_params(p, temperature, eps=1e-5):
    """Fold eval-mode BN into fc, 1/T into the concatenated head weights."""
    bn_scale = p["bn_gamma"] * jax.lax.rsqrt(p["bn_var"] + eps)         # (1, A)
    fc_w = p["fc_w"] * bn_scale                                         # (C_in, A)
    fc_b = p["bn_beta"] - p["bn_mean"] * bn_scale                       # (1, A)
    inv_t = 1.0 / temperature
    head_w = jnp.concatenate(
        [p["ch_w"], p["fil_w"], p["sp_w"], p["ker_w"]], axis=1) * inv_t  # (A, D)
    head_b = jnp.concatenate(
        [p["ch_b"], p["fil_b"], p["sp_b"], p["ker_b"]], axis=1) * inv_t  # (1, D)
    return fc_w, fc_b, head_w, head_b


def _im2col_3x3(x_nchw, K):
    """(B, C, H, W) -> (B, H*W, K*K*C) patches, stride=1, padding=(K-1)//2."""
    # TODO(synk): patch extraction / layout shuffles run as XLA ops in the
    # wrapper; a halo-exchange BlockSpec pipeline would be needed to keep this
    # fully on-chip for very large feature maps.
    B, C, H, W = x_nchw.shape
    pad = (K - 1) // 2
    xp = jnp.pad(x_nchw, ((0, 0), (0, 0), (pad, pad), (pad, pad)))
    cols = [xp[:, :, dy:dy + H, dx:dx + W] for dy in range(K) for dx in range(K)]
    pat = jnp.stack(cols, axis=1)                      # (B, K2, C, H, W)
    pat = jnp.transpose(pat, (0, 3, 4, 1, 2))          # (B, H, W, K2, C)
    return pat.reshape(B, H * W, K * K * C)


def _odconv2d_forward(x_nchw, att_params, conv_w, *, kernel_size, kernel_num,
                      temperature=1.0, residual_hwc=None):
    """One ODConv2d + trailing ReLU. Returns (B, H*W, C_out) channels-last.
    If residual_hwc is given, also fuses relu(out + residual) (block epilogue)."""
    B, C_in, H, W = x_nchw.shape
    Kn, C_out, _, K, _ = conv_w.shape
    assert K == kernel_size and Kn == kernel_num
    HW, K2 = H * W, K * K
    x_chw = x_nchw.reshape(B, C_in, HW)

    # ---- Attention_od (Pallas kernel #1, single lane-dense output) ----
    fc_w, fc_b, head_w, head_b = _fold_attention_params(att_params, temperature)
    d_tot = head_w.shape[1]
    vmem = pl.BlockSpec(memory_space=pltpu.MemorySpace.VMEM)
    att = pl.pallas_call(
        functools.partial(_attention_kernel, kernel_num),
        out_shape=jax.ShapeDtypeStruct((B, d_tot), jnp.float32),
        in_specs=[vmem] * 5,
        out_specs=vmem,
    )(x_chw, fc_w, fc_b, head_w, head_b)

    # Split the fused attention vector in the wrapper (matches concat order).
    ch = att[:, :C_in]                                    # (B, C_in)
    fil = att[:, C_in:C_in + C_out]                       # (B, C_out)
    sp = att[:, C_in + C_out:C_in + C_out + K2]           # (B, K*K)
    ker = att[:, C_in + C_out + K2:]                      # (B, Kn)

    # spatial(ky,kx) x channel(ci) attention -> one per-patch-column scale.
    scale = (sp[:, :, None] * ch[:, None, :]).reshape(B, 1, K2 * C_in)
    fil_r = fil.reshape(B, 1, C_out)
    ker_r = ker.reshape(B, 1, Kn)

    patches = _im2col_3x3(x_nchw, K)                                  # (B, HW, K2*Cin)
    # (Kn, C_out, C_in, K, K) -> (Kn, (ky,kx,ci), C_out)
    w_r = jnp.transpose(conv_w, (0, 3, 4, 2, 1)).reshape(Kn, K2 * C_in, C_out)

    P = K2 * C_in
    with_res = residual_hwc is not None
    inputs = [patches, scale, ker_r, w_r, fil_r]
    in_specs = [
        pl.BlockSpec((1, HW, P), lambda b: (b, 0, 0)),
        pl.BlockSpec((1, 1, P), lambda b: (b, 0, 0)),
        pl.BlockSpec((1, 1, Kn), lambda b: (b, 0, 0)),
        pl.BlockSpec((Kn, P, C_out), lambda b: (0, 0, 0)),   # resident weights
        pl.BlockSpec((1, 1, C_out), lambda b: (b, 0, 0)),
    ]
    if with_res:
        inputs.append(residual_hwc)
        in_specs.append(pl.BlockSpec((1, HW, C_out), lambda b: (b, 0, 0)))

    out = pl.pallas_call(
        functools.partial(_odconv_kernel, with_res),
        out_shape=jax.ShapeDtypeStruct((B, HW, C_out), jnp.float32),
        grid=(B,),
        in_specs=in_specs,
        out_specs=pl.BlockSpec((1, HW, C_out), lambda b: (b, 0, 0)),
        compiler_params=pltpu.CompilerParams(
            dimension_semantics=("parallel",)),   # v7x: shard over both TCs
    )(*inputs)
    return out                                           # (B, HW, C_out)


def residual_block_od_forward(x_nchw, params, *, kernel_size=3, kernel_num=4,
                              temperature=1.0):
    """ResidualBlock_od.forward: relu(ODConv->ReLU->ODConv->ReLU (x) + x)."""
    B, C, H, W = x_nchw.shape
    att1, w1 = params["od1"]
    att2, w2 = params["od2"]

    y1 = _odconv2d_forward(x_nchw, att1, w1, kernel_size=kernel_size,
                           kernel_num=kernel_num, temperature=temperature)
    y1_nchw = jnp.transpose(y1, (0, 2, 1)).reshape(B, -1, H, W)

    x_hwc = jnp.transpose(x_nchw.reshape(B, C, H * W), (0, 2, 1))   # (B, HW, C)
    y2 = _odconv2d_forward(y1_nchw, att2, w2, kernel_size=kernel_size,
                           kernel_num=kernel_num, temperature=temperature,
                           residual_hwc=x_hwc)
    return jnp.transpose(y2, (0, 2, 1)).reshape(B, -1, H, W)        # NCHW


# ----------------------------- parameter setup ------------------------------

def _kaiming_normal_1x1(key, out_c, in_c):
    # kaiming_normal_(mode='fan_out', relu) for a 1x1 conv: std = sqrt(2/out_c)
    std = (2.0 / out_c) ** 0.5
    w_oihw = std * jax.random.normal(key, (out_c, in_c), dtype=jnp.float32)
    return jnp.transpose(w_oihw)  # (in_c, out_c) for right-multiplication


def init_odconv_params(key, in_planes, out_planes, kernel_size, kernel_num=4,
                       reduction=0.0625, min_channel=16):
    A = max(int(in_planes * reduction), min_channel)
    ks = jax.random.split(key, 6)
    att = {
        "fc_w": _kaiming_normal_1x1(ks[0], A, in_planes),
        "bn_gamma": jnp.ones((1, A), jnp.float32),
        "bn_beta": jnp.zeros((1, A), jnp.float32),
        "bn_mean": jnp.zeros((1, A), jnp.float32),
        "bn_var": jnp.ones((1, A), jnp.float32),
        "ch_w": _kaiming_normal_1x1(ks[1], in_planes, A),
        "ch_b": jnp.zeros((1, in_planes), jnp.float32),
        "fil_w": _kaiming_normal_1x1(ks[2], out_planes, A),
        "fil_b": jnp.zeros((1, out_planes), jnp.float32),
        "sp_w": _kaiming_normal_1x1(ks[3], kernel_size * kernel_size, A),
        "sp_b": jnp.zeros((1, kernel_size * kernel_size), jnp.float32),
        "ker_w": _kaiming_normal_1x1(ks[4], kernel_num, A),
        "ker_b": jnp.zeros((1, kernel_num), jnp.float32),
    }
    # ODConv2d.weight ~ kaiming_normal_(fan_out) per candidate kernel.
    std = (2.0 / (out_planes * kernel_size * kernel_size)) ** 0.5
    conv_w = std * jax.random.normal(
        ks[5], (kernel_num, out_planes, in_planes, kernel_size, kernel_size),
        dtype=jnp.float32)
    return att, conv_w


# ------------------------------ pure-JAX reference ---------------------------

def _ref_attention(x_nchw, p, temperature=1.0):
    pooled = jnp.mean(x_nchw, axis=(2, 3))
    h = pooled @ p["fc_w"]
    h = (h - p["bn_mean"]) / jnp.sqrt(p["bn_var"] + 1e-5) * p["bn_gamma"] \
        + p["bn_beta"]
    h = jnp.maximum(h, 0.0)
    ch = jax.nn.sigmoid((h @ p["ch_w"] + p["ch_b"]) / temperature)
    fil = jax.nn.sigmoid((h @ p["fil_w"] + p["fil_b"]) / temperature)
    sp = jax.nn.sigmoid((h @ p["sp_w"] + p["sp_b"]) / temperature)
    ker = jax.nn.softmax((h @ p["ker_w"] + p["ker_b"]) / temperature, axis=-1)
    return ch, fil, sp, ker


def _ref_odconv(x, p, w, K, Kn, temperature=1.0):
    B, C_in, H, W = x.shape
    C_out = w.shape[1]
    ch, fil, sp, ker = _ref_attention(x, p, temperature)
    xs = x * ch[:, :, None, None]
    agg = jnp.sum(sp.reshape(B, 1, 1, 1, K, K) * ker.reshape(B, Kn, 1, 1, 1, 1)
                  * w[None], axis=1)                        # (B, Cout, Cin, K, K)
    xp = jnp.pad(xs, ((0, 0), (0, 0), (1, 1), (1, 1)))
    out = jnp.zeros((B, C_out, H, W), jnp.float32)
    for ky in range(K):
        for kx in range(K):
            out = out + jnp.einsum('bchw,boc->bohw',
                                   xp[:, :, ky:ky + H, kx:kx + W],
                                   agg[:, :, :, ky, kx])
    return out * fil[:, :, None, None]


def _ref_residual_block(x, att1, w1, att2, w2, K, Kn, temperature=1.0):
    y1 = jnp.maximum(_ref_odconv(x, att1, w1, K, Kn, temperature), 0.0)
    y2 = jnp.maximum(_ref_odconv(y1, att2, w2, K, Kn, temperature), 0.0)
    return jnp.maximum(y2 + x, 0.0)


# ----------------------------------- main ------------------------------------

if __name__ == "__main__":
    B, C, H, W = 2, 4, 16, 16
    K, Kn = 3, 4

    key = jax.random.PRNGKey(0)
    kx, k1, k2 = jax.random.split(key, 3)
    x = jax.random.normal(kx, (B, C, H, W), dtype=jnp.float32)

    att1, w1 = init_odconv_params(k1, C, C, K, kernel_num=Kn)
    att2, w2 = init_odconv_params(k2, C, C, K, kernel_num=Kn)
    params = {"od1": (att1, w1), "od2": (att2, w2)}

    out = residual_block_od_forward(x, params, kernel_size=K, kernel_num=Kn,
                                    temperature=1.0)
    out = jax.block_until_ready(out)

    ref = _ref_residual_block(x, att1, w1, att2, w2, K, Kn, temperature=1.0)
    np.testing.assert_allclose(np.asarray(out), np.asarray(ref),
                               rtol=1e-3, atol=1e-3)

    print("KERNEL_OK")
</pallas_src>

<mosaic_0001>
module attributes {stable_mosaic.version = 11 : i64} {
  func.func @_attention_kernel(%arg0: memref<2x4x256xf32, #tpu.memory_space<vmem>>, %arg1: memref<4x16xf32, #tpu.memory_space<vmem>>, %arg2: memref<1x16xf32, #tpu.memory_space<vmem>>, %arg3: memref<16x21xf32, #tpu.memory_space<vmem>>, %arg4: memref<1x21xf32, #tpu.memory_space<vmem>>, %arg5: memref<2x21xf32, #tpu.memory_space<vmem>>) attributes {dimension_semantics = [], scalar_prefetch = 0 : i64, scratch_operands = 0 : i64, tpu.core_type = #tpu.core_type<tc>} {
    %c0 = arith.constant 0 : index
    %c0_0 = arith.constant 0 : index
    %c0_1 = arith.constant 0 : index
    %0 = vector.load %arg0[%c0, %c0_0, %c0_1] : memref<2x4x256xf32, #tpu.memory_space<vmem>>, vector<2x4x256xf32>
    %cst = arith.constant dense<0.000000e+00> : vector<2x4xf32>
    %1 = vector.multi_reduction <add>, %0, %cst [2] : vector<2x4x256xf32> to vector<2x4xf32>
    %cst_2 = arith.constant 2.560000e+02 : f32
    %2 = vector.broadcast %cst_2 : f32 to vector<2x4xf32>
    %3 = arith.divf %1, %2 : vector<2x4xf32>
    %c0_3 = arith.constant 0 : index
    %c0_4 = arith.constant 0 : index
    %4 = vector.load %arg1[%c0_3, %c0_4] : memref<4x16xf32, #tpu.memory_space<vmem>>, vector<4x16xf32>
    %cst_5 = arith.constant dense<0.000000e+00> : vector<2x16xf32>
    %5 = tpu.matmul %3, %4, %cst_5 {dimension_numbers = #tpu.dot_dimension_numbers<[1], [0], [0], [1], [0, 0, 1, 1], [], []>} : vector<2x4xf32>, vector<4x16xf32>, vector<2x16xf32> -> vector<2x16xf32>
    %c0_6 = arith.constant 0 : index
    %c0_7 = arith.constant 0 : index
    %6 = vector.load %arg2[%c0_6, %c0_7] : memref<1x16xf32, #tpu.memory_space<vmem>>, vector<1x16xf32>
    %7 = vector.broadcast %6 : vector<1x16xf32> to vector<2x16xf32>
    %8 = arith.addf %5, %7 : vector<2x16xf32>
    %cst_8 = arith.constant 0.000000e+00 : f32
    %9 = vector.broadcast %cst_8 : f32 to vector<2x16xf32>
    %10 = arith.maximumf %8, %9 : vector<2x16xf32>
    %c0_9 = arith.constant 0 : index
    %c0_10 = arith.constant 0 : index
    %11 = vector.load %arg3[%c0_9, %c0_10] : memref<16x21xf32, #tpu.memory_space<vmem>>, vector<16x21xf32>
    %cst_11 = arith.constant dense<0.000000e+00> : vector<2x21xf32>
    %12 = tpu.matmul %10, %11, %cst_11 {dimension_numbers = #tpu.dot_dimension_numbers<[1], [0], [0], [1], [0, 0, 1, 1], [], []>} : vector<2x16xf32>, vector<16x21xf32>, vector<2x21xf32> -> vector<2x21xf32>
    %c0_12 = arith.constant 0 : index
    %c0_13 = arith.constant 0 : index
    %13 = vector.load %arg4[%c0_12, %c0_13] : memref<1x21xf32, #tpu.memory_space<vmem>>, vector<1x21xf32>
    %14 = vector.broadcast %13 : vector<1x21xf32> to vector<2x21xf32>
    %15 = arith.addf %12, %14 : vector<2x21xf32>
    %16 = tpu.iota {dimensions = array<i32: 1>} : vector<2x21xi32>
    %c17_i32 = arith.constant 17 : i32
    %17 = vector.broadcast %c17_i32 : i32 to vector<2x21xi32>
    %18 = arith.cmpi sge, %16, %17 : vector<2x21xi32>
    %19 = arith.negf %15 : vector<2x21xf32>
    %20 = math.exp %19 : vector<2x21xf32>
    %cst_14 = arith.constant 1.000000e+00 : f32
    %21 = vector.broadcast %cst_14 : f32 to vector<2x21xf32>
    %22 = arith.addf %21, %20 : vector<2x21xf32>
    %23 = arith.divf %21, %22 : vector<2x21xf32>
    %cst_15 = arith.constant 0xFF800000 : f32
    %24 = vector.broadcast %cst_15 : f32 to vector<2x21xf32>
    %25 = arith.select %18, %15, %24 : vector<2x21xi1>, vector<2x21xf32>
    %cst_16 = arith.constant dense<0xFF800000> : vector<2xf32>
    %26 = vector.multi_reduction <maximumf>, %25, %cst_16 [1] : vector<2x21xf32> to vector<2xf32>
    %27 = vector.shape_cast %26 : vector<2xf32> to vector<2x1xf32>
    %28 = vector.broadcast %27 : vector<2x1xf32> to vector<2x21xf32>
    %29 = arith.subf %25, %28 : vector<2x21xf32>
    %30 = math.exp %29 : vector<2x21xf32>
    %cst_17 = arith.constant 0.000000e+00 : f32
    %31 = vector.broadcast %cst_17 : f32 to vector<2x21xf32>
    %32 = arith.select %18, %30, %31 : vector<2x21xi1>, vector<2x21xf32>
    %cst_18 = arith.constant dense<0.000000e+00> : vector<2xf32>
    %33 = vector.multi_reduction <add>, %32, %cst_18 [1] : vector<2x21xf32> to vector<2xf32>
    %34 = vector.shape_cast %33 : vector<2xf32> to vector<2x1xf32>
    %35 = tpu.reciprocal %34 : vector<2x1xf32> -> vector<2x1xf32>
    %36 = vector.broadcast %35 : vector<2x1xf32> to vector<2x21xf32>
    %37 = arith.mulf %32, %36 : vector<2x21xf32>
    %38 = arith.select %18, %37, %23 : vector<2x21xi1>, vector<2x21xf32>
    %c0_19 = arith.constant 0 : index
    %c0_20 = arith.constant 0 : index
    %39 = vector.load %arg5[%c0_19, %c0_20] : memref<2x21xf32, #tpu.memory_space<vmem>>, vector<2x21xf32>
    tpu.vector_store %arg5[%c0_19, %c0_20], %38 {strides = array<i32>} : memref<2x21xf32, #tpu.memory_space<vmem>>, vector<2x21xf32>,
    return
  }
}

</mosaic_0001>

<llo_original>
// kernel: tpu_custom_call.1
$region0: #{tpu_custom_call.1}
  #allocation0 [shape = 'u32[]', space=smem, size = 0x4, offset = 0x4, fixed_abs, tag = 'smem constant byte address 0x4 - core index']
  #allocation1 [shape = 'u32[144,128]{1,0:T(1,128)}', space=vmem, size = 0x12000, scoped, tag = 'internal scratch']
  %s0 = inlined_call_operand.hbm [shape: f32[2,4,256], index: 0, kind: input, shape index: {}]
  %s1 = inlined_call_operand.hbm [shape: f32[4,16], index: 1, kind: input, shape index: {}]
  %s2 = inlined_call_operand.vmem [shape: f32[1,16], index: 2, kind: input, shape index: {}]
  %s3 = inlined_call_operand.hbm [shape: f32[16,21], index: 3, kind: input, shape index: {}]
  %s4 = inlined_call_operand.vmem [shape: f32[1,21], index: 4, kind: input, shape index: {}]
  %s5 = inlined_call_operand.hbm [shape: f32[2,21], index: 5, kind: output, shape index: {}]
  %s6 = sld [smem:[#allocation0]]
  $region42: #{tpu_custom_call.1} parent=0
    _
  %s8 = ssub.s32 1, %s6
  %s9 = scalar_select 0, %s8, %s6
  $region1: #{tpu_custom_call.1} parent=0
    #allocation2 [shape = 'u8[8192]{0}', space=vmem, size = 0x2000, scoped, tag = 'input window, operand 0, single buffered']
    #allocation3 [shape = 's32[1]{0}', space=sflag, size = 0x4, scoped, tag = 'scoped memory for tpu_custom_call.1']
    #allocation4 [shape = 's32[1]{0}', space=sflag, size = 0x4, scoped, tag = 'scoped memory for tpu_custom_call.1']
    #allocation5 [shape = 'u8[2048]{0}', space=vmem, size = 0x800, scoped, tag = 'input window, operand 1, single buffered']
    #allocation6 [shape = 's32[1]{0}', space=sflag, size = 0x4, scoped, tag = 'scoped memory for tpu_custom_call.1']
    #allocation7 [shape = 'u8[8192]{0}', space=vmem, size = 0x2000, scoped, tag = 'input window, operand 3, single buffered']
    #allocation8 [shape = 'u8[1024]{0}', space=vmem, size = 0x400, scoped, tag = 'output window, operand 0, single buffered']
    %10 = vsyncpa [#allocation3], 0
    %11 = vsyncpa [#allocation6], 0
    %12 = vsyncpa [#allocation4], 0
    // Predicated region
    $region2: #{tpu_custom_call.1} parent=1 // pred_check
      _
    $region3: #{tpu_custom_call.1} parent=1 // pred_check_branch
      %14 = sbr.rel (0) target = $region5
    $region4: #{tpu_custom_call.1} parent=1 // pred_region
      %s16 = ssub.s32 256, 256
      %17 = vsyncadd [#allocation3], %s16
      %s18 = sshll.u32 [#allocation2], 4
      %s19 = int_to_ptr.vmem [resolvable:$true] %s18
      %24 = dma.hbm_to_vmem [thread:$0]  %s0, 256, %s19, [#allocation3], 128, 128, 8
    $region5: #{tpu_custom_call.1} parent=1 // pred_fallthru
      _
    // Predicated region
    $region6: #{tpu_custom_call.1} parent=1 // pred_check
      _
    $region7: #{tpu_custom_call.1} parent=1 // pred_check_branch
      %26 = sbr.rel (0) target = $region9
    $region8: #{tpu_custom_call.1} parent=1 // pred_region
      %s28 = ssub.s32 64, 64
      %29 = vsyncadd [#allocation6], %s28
      %s31 = sshll.u32 [#allocation5], 4
      %s32 = int_to_ptr.vmem [resolvable:$true] %s31
      %34 = dma.hbm_to_vmem [thread:$0]  %s1, 64, %s32, [#allocation6]
    $region9: #{tpu_custom_call.1} parent=1 // pred_fallthru
      _
    // Predicated region
    $region10: #{tpu_custom_call.1} parent=1 // pred_check
      _
    $region11: #{tpu_custom_call.1} parent=1 // pred_check_branch
      %36 = sbr.rel (0) target = $region13
    $region12: #{tpu_custom_call.1} parent=1 // pred_region
      _
    $region13: #{tpu_custom_call.1} parent=1 // pred_fallthru
      _
    // Predicated region
    $region14: #{tpu_custom_call.1} parent=1 // pred_check
      _
    $region15: #{tpu_custom_call.1} parent=1 // pred_check_branch
      %38 = sbr.rel (0) target = $region17
    $region16: #{tpu_custom_call.1} parent=1 // pred_region
      %s40 = ssub.s32 256, 256
      %41 = vsyncadd [#allocation6], %s40
      %s42 = sshll.u32 [#allocation7], 4
      %s43 = int_to_ptr.vmem [resolvable:$true] %s42
      %48 = dma.hbm_to_vmem [thread:$0]  %s3, 256, %s43, [#allocation6], 128, 128, 8
    $region17: #{tpu_custom_call.1} parent=1 // pred_fallthru
      _
    // Predicated region
    $region18: #{tpu_custom_call.1} parent=1 // pred_check
      _
    $region19: #{tpu_custom_call.1} parent=1 // pred_check_branch
      %50 = sbr.rel (0) target = $region21
    $region20: #{tpu_custom_call.1} parent=1 // pred_region
      _
    $region21: #{tpu_custom_call.1} parent=1 // pred_fallthru
      _
    // Predicated region
    $region22: #{tpu_custom_call.1} parent=1 // pred_check
      _
    $region23: #{tpu_custom_call.1} parent=1 // pred_check_branch
      %52 = sbr.rel (0) target = $region25
    $region24: #{tpu_custom_call.1} parent=1 // pred_region
      %53 = dma.done [#allocation3], 256
    $region25: #{tpu_custom_call.1} parent=1 // pred_fallthru
      _
    // Predicated region
    $region26: #{tpu_custom_call.1} parent=1 // pred_check
      _
    $region27: #{tpu_custom_call.1} parent=1 // pred_check_branch
      %55 = sbr.rel (0) target = $region29
    $region28: #{tpu_custom_call.1} parent=1 // pred_region
      %56 = dma.done [#allocation6], 64
    $region29: #{tpu_custom_call.1} parent=1 // pred_fallthru
      _
    // Predicated region
    $region30: #{tpu_custom_call.1} parent=1 // pred_check
      _
    $region31: #{tpu_custom_call.1} parent=1 // pred_check_branch
      %58 = sbr.rel (0) target = $region33
    $region32: #{tpu_custom_call.1} parent=1 // pred_region
      %59 = dma.done [#allocation6], 256
    $region33: #{tpu_custom_call.1} parent=1 // pred_fallthru
      _
    %v60 = vld [vmem:[#allocation2] sm:$0xff]
    %v61 = vld [vmem:[#allocation2 + $0x8] sm:$0xff]
    %v64 = vcombine.high %v60, %v60
    %v65 = vcombine.high %v61, %v61
    %vm68 = vcmask 1043456
    %v69 = vsel %vm68, %v60, 0.0
    %v70 = vsel %vm68, %v64, 0.0
    %v71 = vadd.f32 %v69, %v70
    %72 = vadd.xlane.f32.xlu0 %v71
    %v73 = vpop.xlane.xlu0 %72
    %v74 = vsel %vm68, %v61, 0.0
    %v75 = vsel %vm68, %v65, 0.0
    %v76 = vadd.f32 %v74, %v75
    %77 = vadd.xlane.f32.xlu0 %v76
    %v78 = vpop.xlane.xlu0 %77
    %v79 = vrcp.pop 256.0
    %v80 = vmul.f32 %v73, %v79
    %v81 = vmul.f32 %v78, %v79
    %v82 = vld [vmem:[#allocation5] sm:$0xf]
    %v83 = vld [vmem:[%s2] sm:$0x1]
    %v85 = vlaneseq
    %v86 = vshrl.u32 %v85, 7
    %v87 = vsub.s32 0, %v86
    %v88 = vrot.slane %v83, %v87
    %v92 = vlaneseq
    %v93 = vand.u32 %v92, 127
    %v94 = vlaneseq
    %v95 = vshrl.u32 %v94, 7
    %v96 = vsub.s32 %v93, %v95
    %v97 = vrot.slane %v80, %v96
    %v98 = vlaneseq
    %v99 = vshrl.u32 %v98, 7
    %v100 = vsub.s32 %v93, %v99
    %v101 = vrot.slane %v81, %v100
    %vm102 = vcmask 1041409
    %v103 = vsel %vm102, %v101, %v97
    %vm104 = vcmask 31744
    %v105 = vsel %vm104, %v103, 0
    %v108 = vsel %vm68, %v82, 0
    %110 = vmatprep.subr.mxu0 0.0
    %111 = vmatpush1.msra.mxu0 %v108
    %112 = vmatprep.subr.mxu0 0.0
    %113 = vmatpush1.msra.mxu0 0.0
    %114 = vmatprep.subr.mxu0 0.0
    %115 = vmatpush1.msra.mxu0 0.0
    %116 = vmatprep.subr.mxu0 0.0
    %117 = vmatpush1.msra.mxu0 0.0
    %118 = vmatprep.subr.mxu0 0.0
    %119 = vmatpush1.msra.mxu0 0.0
    %120 = vmatprep.subr.mxu0 0.0
    %121 = vmatpush1.msra.mxu0 0.0
    %122 = vmatprep.subr.mxu0 0.0
    %123 = vmatpush1.msra.mxu0 0.0
    %124 = vmatprep.subr.mxu0 0.0
    %125 = vmatpush1.msra.mxu0 0.0
    %126 = vmatprep.subr.mxu0 0.0
    %127 = vmatpush1.msra.mxu0 0.0
    %128 = vmatprep.subr.mxu0 0.0
    %129 = vmatpush1.msra.mxu0 0.0
    %130 = vmatprep.subr.mxu0 0.0
    %131 = vmatpush1.msra.mxu0 0.0
    %132 = vmatprep.subr.mxu0 0.0
    %133 = vmatpush1.msra.mxu0 0.0
    %134 = vmatprep.subr.mxu0 0.0
    %135 = vmatpush1.msra.mxu0 0.0
    %136 = vmatprep.subr.mxu0 0.0
    %137 = vmatpush1.msra.mxu0 0.0
    %138 = vmatprep.subr.mxu0 0.0
    %139 = vmatpush1.msra.mxu0 0.0
    %140 = vmatprep.subr.mxu0 0.0
    %141 = vmatpush1.msra.mxu0 0.0
    %142 = vmatprep.subr.mxu0 0.0
    %143 = vmatpush1.msra.mxu0 0.0
    %144 = vmatprep.subr.mxu0 0.0
    %145 = vmatpush1.msra.mxu0 0.0
    %146 = vmatprep.subr.mxu0 0.0
    %147 = vmatpush1.msra.mxu0 0.0
    %148 = vmatprep.subr.mxu0 0.0
    %149 = vmatpush1.msra.mxu0 0.0
    %150 = vmatprep.subr.mxu0 0.0
    %151 = vmatpush1.msra.mxu0 0.0
    %152 = vmatprep.subr.mxu0 0.0
    %153 = vmatpush1.msra.mxu0 0.0
    %154 = vmatprep.subr.mxu0 0.0
    %155 = vmatpush1.msra.mxu0 0.0
    %156 = vmatprep.subr.mxu0 0.0
    %157 = vmatpush1.msra.mxu0 0.0
    %158 = vmatprep.subr.mxu0 0.0
    %159 = vmatpush1.msra.mxu0 0.0
    %160 = vmatprep.subr.mxu0 0.0
    %161 = vmatpush1.msra.mxu0 0.0
    %162 = vmatprep.subr.mxu0 0.0
    %163 = vmatpush1.msra.mxu0 0.0
    %164 = vmatprep.subr.mxu0 0.0
    %165 = vmatpush1.msra.mxu0 0.0
    %166 = vmatprep.subr.mxu0 0.0
    %167 = vmatpush1.msra.mxu0 0.0
    %168 = vmatprep.subr.mxu0 0.0
    %169 = vmatpush1.msra.mxu0 0.0
    %170 = vmatprep.subr.mxu0 0.0
    %171 = vmatpush1.msra.mxu0 0.0
    %172 = vmatprep.subr.mxu0 0.0
    %173 = vmatpush1.msra.mxu0 0.0
    %174 = vmatprep.mubr.f32.mxu0 0.0
    %175 = vmatmul.mubr.f32.gmra.mrb[0].mxu0 %v105
    %v176 = vpop.f32.mrb[0].mxu0
    %v177 = vadd.f32 %v88, %v176
    %v178 = vpop.f32.mrb[0].mxu0
    %179 = vdwg.mxu0
    %v180 = vmax.f32 %v177, 0.0
    %v181 = vld [vmem:[#allocation7] sm:$0xff]
    %v182 = vld [vmem:[#allocation7 + $0x8] sm:$0xff]
    %v183 = vld [vmem:[%s4] sm:$0x1]
    %v185 = vlaneseq
    %v186 = vshrl.u32 %v185, 7
    %v187 = vsub.s32 0, %v186
    %v188 = vrot.slane %v183, %v187
    %vm190 = vcmask 130048
    %v192 = vsel %vm190, %v180, 0
    %194 = vmatprep.subr.mxu0 0.0
    %195 = vmatpush1.msra.mxu0 %v181
    %196 = vmatprep.subr.mxu0 0.0
    %197 = vmatpush1.msra.mxu0 %v182
    %198 = vmatprep.subr.mxu0 0.0
    %199 = vmatpush1.msra.mxu0 0.0
    %200 = vmatprep.subr.mxu0 0.0
    %201 = vmatpush1.msra.mxu0 0.0
    %202 = vmatprep.subr.mxu0 0.0
    %203 = vmatpush1.msra.mxu0 0.0
    %204 = vmatprep.subr.mxu0 0.0
    %205 = vmatpush1.msra.mxu0 0.0
    %206 = vmatprep.subr.mxu0 0.0
    %207 = vmatpush1.msra.mxu0 0.0
    %208 = vmatprep.subr.mxu0 0.0
    %209 = vmatpush1.msra.mxu0 0.0
    %210 = vmatprep.subr.mxu0 0.0
    %211 = vmatpush1.msra.mxu0 0.0
    %212 = vmatprep.subr.mxu0 0.0
    %213 = vmatpush1.msra.mxu0 0.0
    %214 = vmatprep.subr.mxu0 0.0
    %215 = vmatpush1.msra.mxu0 0.0
    %216 = vmatprep.subr.mxu0 0.0
    %217 = vmatpush1.msra.mxu0 0.0
    %218 = vmatprep.subr.mxu0 0.0
    %219 = vmatpush1.msra.mxu0 0.0
    %220 = vmatprep.subr.mxu0 0.0
    %221 = vmatpush1.msra.mxu0 0.0
    %222 = vmatprep.subr.mxu0 0.0
    %223 = vmatpush1.msra.mxu0 0.0
    %224 = vmatprep.subr.mxu0 0.0
    %225 = vmatpush1.msra.mxu0 0.0
    %226 = vmatprep.subr.mxu0 0.0
    %227 = vmatpush1.msra.mxu0 0.0
    %228 = vmatprep.subr.mxu0 0.0
    %229 = vmatpush1.msra.mxu0 0.0
    %230 = vmatprep.subr.mxu0 0.0
    %231 = vmatpush1.msra.mxu0 0.0
    %232 = vmatprep.subr.mxu0 0.0
    %233 = vmatpush1.msra.mxu0 0.0
    %234 = vmatprep.subr.mxu0 0.0
    %235 = vmatpush1.msra.mxu0 0.0
    %236 = vmatprep.subr.mxu0 0.0
    %237 = vmatpush1.msra.mxu0 0.0
    %238 = vmatprep.subr.mxu0 0.0
    %239 = vmatpush1.msra.mxu0 0.0
    %240 = vmatprep.subr.mxu0 0.0
    %241 = vmatpush1.msra.mxu0 0.0
    %242 = vmatprep.subr.mxu0 0.0
    %243 = vmatpush1.msra.mxu0 0.0
    %244 = vmatprep.subr.mxu0 0.0
    %245 = vmatpush1.msra.mxu0 0.0
    %246 = vmatprep.subr.mxu0 0.0
    %247 = vmatpush1.msra.mxu0 0.0
    %248 = vmatprep.subr.mxu0 0.0
    %249 = vmatpush1.msra.mxu0 0.0
    %250 = vmatprep.subr.mxu0 0.0
    %251 = vmatpush1.msra.mxu0 0.0
    %252 = vmatprep.subr.mxu0 0.0
    %253 = vmatpush1.msra.mxu0 0.0
    %254 = vmatprep.subr.mxu0 0.0
    %255 = vmatpush1.msra.mxu0 0.0
    %256 = vmatprep.subr.mxu0 0.0
    %257 = vmatpush1.msra.mxu0 0.0
    %258 = vmatprep.mubr.f32.mxu0 0.0
    %259 = vmatmul.mubr.f32.gmra.mrb[0].mxu0 %v192
    %v260 = vpop.f32.mrb[0].mxu0
    %v261 = vadd.f32 %v188, %v260
    %v262 = vpop.f32.mrb[0].mxu0
    %263 = vdwg.mxu0
    %vm264 = vcmp.ge.s32.totalorder %v93, 17
    %v265 = vxor.u32 %v261, 2147483648
    %v266 = vmul.f32 %v265, 1.442695
    %v267 = vpow.pop %v266
    %v268 = vadd.f32 %v267, 1.0
    %v269 = vrcp.pop %v268
    %v270 = vmul.f32 1.0, %v269
    %v271 = vsel %vm264, %v261, -inf
    %vm272 = vcmask 164864
    %v273 = vsel %vm272, %v271, -inf
    %274 = vmax.xlane.f32.xlu0 %v273
    %v275 = vpop.xlane.xlu0 %274
    %v276 = vsub.f32 %v271, %v275
    %v277 = vmul.f32 %v276, 1.442695
    %v278 = vpow.pop %v277
    %v279 = vsel %vm264, %v278, 0.0
    %v280 = vsel %vm272, %v279, 0.0
    %281 = vadd.xlane.f32.xlu0 %v280
    %v282 = vpop.xlane.xlu0 %281
    %v283 = vrcp.pop %v282
    %v284 = vmul.f32 %v279, %v283
    %v285 = vsel %vm264, %v284, %v270
    %286 = vst.msk [vmem:[#allocation8] sm:$0x3] %vm272, %v285
    // Predicated region
    $region34: #{tpu_custom_call.1} parent=1 // pred_check
      _
    $region35: #{tpu_custom_call.1} parent=1 // pred_check_branch
      %288 = sbr.rel (0) target = $region37
    $region36: #{tpu_custom_call.1} parent=1 // pred_region
      %s290 = ssub.s32 32, 32
      %291 = vsyncadd [#allocation4], %s290
      %s293 = sshll.u32 [#allocation8], 4
      %s294 = int_to_ptr.vmem [resolvable:$true] %s293
      %296 = dma.vmem_to_hbm [thread:$0]  %s294, 32, %s5, [#allocation4]
    $region37: #{tpu_custom_call.1} parent=1 // pred_fallthru
      _
    // Predicated region
    $region38: #{tpu_custom_call.1} parent=1 // pred_check
      _
    $region39: #{tpu_custom_call.1} parent=1 // pred_check_branch
      %298 = sbr.rel (0) target = $region41
    $region40: #{tpu_custom_call.1} parent=1 // pred_region
      %299 = dma.done [#allocation4], 32
    $region41: #{tpu_custom_call.1} parent=1 // pred_fallthru
      _
    %300 = vsyncpa [#allocation3], 1
    %301 = vsyncpa [#allocation6], 1
    %302 = vsyncpa [#allocation4], 1

</llo_original>
